<compile_context>
chip_gen: v7x
topology: tpu7x:2x2x1
jax: 0.10.0
libtpu: 0.0.40
codegen_flags: <defaults>
</compile_context>

<pallas_src>
import jax
import jax.numpy as jnp
from jax.experimental import pallas as pl
from jax.experimental.pallas import tpu as pltpu

_LANES = 128
_SUBLANES = 8
_TILE_QUANTUM = _LANES * _SUBLANES  # 1024: keeps the (sb, 128) block (8,128)-aligned


def _round_up(x, m):
    return ((x + m - 1) // m) * m


def decoder_kernel(z_ref, w1_ref, b1_ref, w2_ref, b2_ref, o_ref):
    # z_ref : [IN, SB, 128]  VMEM (batch dense on sublanes x lanes)
    # w1_ref: [HID, IN]      SMEM scalars
    # b1_ref: [HID]          SMEM scalars
    # w2_ref: [OUT, HID]     SMEM scalars (pre-scaled by 0.5 in the wrapper)
    # b2_ref: [OUT]          SMEM scalars (pre-scaled by 0.5 in the wrapper)
    # o_ref : [OUT, SB, 128] VMEM
    n_in = z_ref.shape[0]
    n_hid = w1_ref.shape[0]
    n_out = w2_ref.shape[0]

    z = [z_ref[k] for k in range(n_in)]  # each [SB, 128]

    # linear1 + ReLU: scalar-broadcast FMAs on the VPU (K = 2 is too small for MXU).
    h = []
    for j in range(n_hid):
        acc = b1_ref[j] + w1_ref[j, 0] * z[0]
        for k in range(1, n_in):
            acc = acc + w1_ref[j, k] * z[k]
        h.append(jnp.maximum(acc, 0.0))

    # linear2 + sigmoid.  w2/b2 carry the 0.5 pre-scale already, so
    # sigmoid(y) = 0.5*tanh(0.5*y) + 0.5 needs no extra in-kernel scaling
    # (tanh runs on the EUP slot).
    for j in range(n_out):
        y = b2_ref[j] + w2_ref[j, 0] * h[0]
        for k in range(1, n_hid):
            y = y + w2_ref[j, k] * h[k]
        o_ref[j] = 0.5 * jnp.tanh(y) + 0.5


def decoder_forward(z, w1, b1, w2, b2, *, block_b=32768):
    """z: [B, in] (PyTorch layout); w1: [hid, in], b1: [hid], w2: [out, hid], b2: [out]."""
    B, n_in = z.shape
    n_hid = w1.shape[0]
    n_out = w2.shape[0]

    # ---- batch tiling: multiple of 128 lanes (and 8 sublanes when tiled) ----
    b_lanes = _round_up(B, _LANES)
    if b_lanes <= _TILE_QUANTUM:
        # single tile == full array (legal even when sb is not a multiple of 8)
        tb = b_lanes
    else:
        # adapt tile to B; force >= 2 grid steps so both v7x TensorCores get work
        n_tiles = max(2, -(-b_lanes // block_b))
        tb = _round_up(-(-b_lanes // n_tiles), _TILE_QUANTUM)
    grid_n = -(-b_lanes // tb)
    B_pad = grid_n * tb
    sb = tb // _LANES
    nb = B_pad // _LANES

    # ---- single relayout pass: [B, IN] -> [IN, nb, 128] (batch on minor dims) ----
    z_t = jnp.pad(z.T.astype(jnp.float32), ((0, 0), (0, B_pad - B)))
    z_3d = z_t.reshape(n_in, nb, _LANES)

    w1f = w1.astype(jnp.float32)
    b1f = b1.astype(jnp.float32)
    w2f = (0.5 * w2).astype(jnp.float32)  # fold sigmoid's 0.5 pre-scale into weights
    b2f = (0.5 * b2).astype(jnp.float32)

    cost = pl.CostEstimate(
        flops=int(B_pad * (2 * (n_hid * n_in + n_out * n_hid) + 2 * n_out)),
        transcendentals=int(B_pad * n_out),
        bytes_accessed=int(4 * B_pad * (n_in + n_out)),
    )

    out_3d = pl.pallas_call(
        decoder_kernel,
        out_shape=jax.ShapeDtypeStruct((n_out, nb, _LANES), jnp.float32),
        grid=(grid_n,),
        in_specs=[
            pl.BlockSpec((n_in, sb, _LANES), lambda i: (0, i, 0)),      # activations
            pl.BlockSpec(memory_space=pltpu.MemorySpace.SMEM),           # w1 scalars
            pl.BlockSpec(memory_space=pltpu.MemorySpace.SMEM),           # b1 scalars
            pl.BlockSpec(memory_space=pltpu.MemorySpace.SMEM),           # w2 scalars
            pl.BlockSpec(memory_space=pltpu.MemorySpace.SMEM),           # b2 scalars
        ],
        out_specs=pl.BlockSpec((n_out, sb, _LANES), lambda i: (0, i, 0)),
        compiler_params=pltpu.CompilerParams(
            dimension_semantics=("parallel",)),
        cost_estimate=cost,
    )(z_3d, w1f, b1f, w2f, b2f)

    # back to PyTorch layout [B, out] (padded batch lanes hold bias-only garbage, sliced off)
    return out_3d.reshape(n_out, B_pad)[:, :B].T


def init_params(key):
    """PyTorch nn.Linear default init (U(-1/sqrt(fan_in), +1/sqrt(fan_in))), PyTorch layout."""
    k1, k2, k3, k4 = jax.random.split(key, 4)
    bound1 = 1.0 / jnp.sqrt(2.0)
    w1 = jax.random.uniform(k1, (4, 2), jnp.float32, -bound1, bound1)   # [out, in]
    b1 = jax.random.uniform(k2, (4,), jnp.float32, -bound1, bound1)
    bound2 = 1.0 / jnp.sqrt(4.0)
    w2 = jax.random.uniform(k3, (9, 4), jnp.float32, -bound2, bound2)   # [out, in]
    b2 = jax.random.uniform(k4, (9,), jnp.float32, -bound2, bound2)
    return w1, b1, w2, b2


def reference_forward(z, w1, b1, w2, b2):
    h = jnp.maximum(z @ w1.T + b1, 0.0)
    return jax.nn.sigmoid(h @ w2.T + b2)


if __name__ == "__main__":
    key = jax.random.PRNGKey(0)
    kz, kp, kz2 = jax.random.split(key, 3)

    w1, b1, w2, b2 = init_params(kp)

    # small shape consistent with the module (latent dim = 2)
    B = 8
    z = jax.random.normal(kz, (B, 2), dtype=jnp.float32)
    out = jax.block_until_ready(decoder_forward(z, w1, b1, w2, b2))
    ref = reference_forward(z, w1, b1, w2, b2)
    assert out.shape == (B, 9), out.shape
    assert jnp.allclose(out, ref, atol=1e-5, rtol=1e-5), "mismatch vs reference (B=8)"

    # second check that exercises the multi-tile / two-TensorCore grid path
    B2 = 2048
    z2 = jax.random.normal(kz2, (B2, 2), dtype=jnp.float32)
    out2 = jax.block_until_ready(decoder_forward(z2, w1, b1, w2, b2))
    ref2 = reference_forward(z2, w1, b1, w2, b2)
    assert out2.shape == (B2, 9), out2.shape
    assert jnp.allclose(out2, ref2, atol=1e-5, rtol=1e-5), "mismatch vs reference (B=2048)"

    print("KERNEL_OK")
</pallas_src>

<mosaic_0001>
module attributes {stable_mosaic.version = 11 : i64} {
  func.func @decoder_kernel(%arg0: i32, %arg1: memref<2x1x128xf32, #tpu.memory_space<vmem>>, %arg2: memref<4x2xf32, #tpu.memory_space<smem>>, %arg3: memref<4xf32, #tpu.memory_space<smem>>, %arg4: memref<9x4xf32, #tpu.memory_space<smem>>, %arg5: memref<9xf32, #tpu.memory_space<smem>>, %arg6: memref<9x1x128xf32, #tpu.memory_space<vmem>>) attributes {dimension_semantics = [#tpu.dimension_semantics<parallel>], iteration_bounds = array<i64: 1>, scalar_prefetch = 0 : i64, scratch_operands = 0 : i64, tpu.core_type = #tpu.core_type<tc>, window_params = [{transform_indices = @transform_0, window_bounds = array<i64: 2, 1, 128>}, {transform_indices = @transform_1, window_bounds = array<i64: 4, 2>}, {transform_indices = @transform_2, window_bounds = array<i64: 4>}, {transform_indices = @transform_3, window_bounds = array<i64: 9, 4>}, {transform_indices = @transform_4, window_bounds = array<i64: 9>}, {transform_indices = @transform_5, window_bounds = array<i64: 9, 1, 128>}]} {
    %c0 = arith.constant 0 : index
    %c0_0 = arith.constant 0 : index
    %c0_1 = arith.constant 0 : index
    %0 = vector.load %arg1[%c0, %c0_0, %c0_1] : memref<2x1x128xf32, #tpu.memory_space<vmem>>, vector<1x1x128xf32>
    %1 = vector.shape_cast %0 : vector<1x1x128xf32> to vector<1x128xf32>
    %c1 = arith.constant 1 : index
    %c0_2 = arith.constant 0 : index
    %c0_3 = arith.constant 0 : index
    %2 = vector.load %arg1[%c1, %c0_2, %c0_3] : memref<2x1x128xf32, #tpu.memory_space<vmem>>, vector<1x1x128xf32>
    %3 = vector.shape_cast %2 : vector<1x1x128xf32> to vector<1x128xf32>
    %c0_4 = arith.constant 0 : index
    %4 = memref.load %arg3[%c0_4] : memref<4xf32, #tpu.memory_space<smem>>
    %c0_5 = arith.constant 0 : index
    %c0_6 = arith.constant 0 : index
    %5 = memref.load %arg2[%c0_5, %c0_6] : memref<4x2xf32, #tpu.memory_space<smem>>
    %6 = vector.broadcast %5 : f32 to vector<1x128xf32>
    %7 = arith.mulf %6, %1 : vector<1x128xf32>
    %8 = vector.broadcast %4 : f32 to vector<1x128xf32>
    %9 = arith.addf %8, %7 : vector<1x128xf32>
    %c0_7 = arith.constant 0 : index
    %c1_8 = arith.constant 1 : index
    %10 = memref.load %arg2[%c0_7, %c1_8] : memref<4x2xf32, #tpu.memory_space<smem>>
    %11 = vector.broadcast %10 : f32 to vector<1x128xf32>
    %12 = arith.mulf %11, %3 : vector<1x128xf32>
    %13 = arith.addf %9, %12 : vector<1x128xf32>
    %cst = arith.constant 0.000000e+00 : f32
    %14 = vector.broadcast %cst : f32 to vector<1x128xf32>
    %15 = arith.maximumf %13, %14 : vector<1x128xf32>
    %c1_9 = arith.constant 1 : index
    %16 = memref.load %arg3[%c1_9] : memref<4xf32, #tpu.memory_space<smem>>
    %c1_10 = arith.constant 1 : index
    %c0_11 = arith.constant 0 : index
    %17 = memref.load %arg2[%c1_10, %c0_11] : memref<4x2xf32, #tpu.memory_space<smem>>
    %18 = vector.broadcast %17 : f32 to vector<1x128xf32>
    %19 = arith.mulf %18, %1 : vector<1x128xf32>
    %20 = vector.broadcast %16 : f32 to vector<1x128xf32>
    %21 = arith.addf %20, %19 : vector<1x128xf32>
    %c1_12 = arith.constant 1 : index
    %c1_13 = arith.constant 1 : index
    %22 = memref.load %arg2[%c1_12, %c1_13] : memref<4x2xf32, #tpu.memory_space<smem>>
    %23 = vector.broadcast %22 : f32 to vector<1x128xf32>
    %24 = arith.mulf %23, %3 : vector<1x128xf32>
    %25 = arith.addf %21, %24 : vector<1x128xf32>
    %cst_14 = arith.constant 0.000000e+00 : f32
    %26 = vector.broadcast %cst_14 : f32 to vector<1x128xf32>
    %27 = arith.maximumf %25, %26 : vector<1x128xf32>
    %c2 = arith.constant 2 : index
    %28 = memref.load %arg3[%c2] : memref<4xf32, #tpu.memory_space<smem>>
    %c2_15 = arith.constant 2 : index
    %c0_16 = arith.constant 0 : index
    %29 = memref.load %arg2[%c2_15, %c0_16] : memref<4x2xf32, #tpu.memory_space<smem>>
    %30 = vector.broadcast %29 : f32 to vector<1x128xf32>
    %31 = arith.mulf %30, %1 : vector<1x128xf32>
    %32 = vector.broadcast %28 : f32 to vector<1x128xf32>
    %33 = arith.addf %32, %31 : vector<1x128xf32>
    %c2_17 = arith.constant 2 : index
    %c1_18 = arith.constant 1 : index
    %34 = memref.load %arg2[%c2_17, %c1_18] : memref<4x2xf32, #tpu.memory_space<smem>>
    %35 = vector.broadcast %34 : f32 to vector<1x128xf32>
    %36 = arith.mulf %35, %3 : vector<1x128xf32>
    %37 = arith.addf %33, %36 : vector<1x128xf32>
    %cst_19 = arith.constant 0.000000e+00 : f32
    %38 = vector.broadcast %cst_19 : f32 to vector<1x128xf32>
    %39 = arith.maximumf %37, %38 : vector<1x128xf32>
    %c3 = arith.constant 3 : index
    %40 = memref.load %arg3[%c3] : memref<4xf32, #tpu.memory_space<smem>>
    %c3_20 = arith.constant 3 : index
    %c0_21 = arith.constant 0 : index
    %41 = memref.load %arg2[%c3_20, %c0_21] : memref<4x2xf32, #tpu.memory_space<smem>>
    %42 = vector.broadcast %41 : f32 to vector<1x128xf32>
    %43 = arith.mulf %42, %1 : vector<1x128xf32>
    %44 = vector.broadcast %40 : f32 to vector<1x128xf32>
    %45 = arith.addf %44, %43 : vector<1x128xf32>
    %c3_22 = arith.constant 3 : index
    %c1_23 = arith.constant 1 : index
    %46 = memref.load %arg2[%c3_22, %c1_23] : memref<4x2xf32, #tpu.memory_space<smem>>
    %47 = vector.broadcast %46 : f32 to vector<1x128xf32>
    %48 = arith.mulf %47, %3 : vector<1x128xf32>
    %49 = arith.addf %45, %48 : vector<1x128xf32>
    %cst_24 = arith.constant 0.000000e+00 : f32
    %50 = vector.broadcast %cst_24 : f32 to vector<1x128xf32>
    %51 = arith.maximumf %49, %50 : vector<1x128xf32>
    %c0_25 = arith.constant 0 : index
    %52 = memref.load %arg5[%c0_25] : memref<9xf32, #tpu.memory_space<smem>>
    %c0_26 = arith.constant 0 : index
    %c0_27 = arith.constant 0 : index
    %53 = memref.load %arg4[%c0_26, %c0_27] : memref<9x4xf32, #tpu.memory_space<smem>>
    %54 = vector.broadcast %53 : f32 to vector<1x128xf32>
    %55 = arith.mulf %54, %15 : vector<1x128xf32>
    %56 = vector.broadcast %52 : f32 to vector<1x128xf32>
    %57 = arith.addf %56, %55 : vector<1x128xf32>
    %c0_28 = arith.constant 0 : index
    %c1_29 = arith.constant 1 : index
    %58 = memref.load %arg4[%c0_28, %c1_29] : memref<9x4xf32, #tpu.memory_space<smem>>
    %59 = vector.broadcast %58 : f32 to vector<1x128xf32>
    %60 = arith.mulf %59, %27 : vector<1x128xf32>
    %61 = arith.addf %57, %60 : vector<1x128xf32>
    %c0_30 = arith.constant 0 : index
    %c2_31 = arith.constant 2 : index
    %62 = memref.load %arg4[%c0_30, %c2_31] : memref<9x4xf32, #tpu.memory_space<smem>>
    %63 = vector.broadcast %62 : f32 to vector<1x128xf32>
    %64 = arith.mulf %63, %39 : vector<1x128xf32>
    %65 = arith.addf %61, %64 : vector<1x128xf32>
    %c0_32 = arith.constant 0 : index
    %c3_33 = arith.constant 3 : index
    %66 = memref.load %arg4[%c0_32, %c3_33] : memref<9x4xf32, #tpu.memory_space<smem>>
    %67 = vector.broadcast %66 : f32 to vector<1x128xf32>
    %68 = arith.mulf %67, %51 : vector<1x128xf32>
    %69 = arith.addf %65, %68 : vector<1x128xf32>
    %70 = math.tanh %69 : vector<1x128xf32>
    %cst_34 = arith.constant 5.000000e-01 : f32
    %71 = vector.broadcast %cst_34 : f32 to vector<1x128xf32>
    %72 = arith.mulf %71, %70 : vector<1x128xf32>
    %cst_35 = arith.constant 5.000000e-01 : f32
    %73 = vector.broadcast %cst_35 : f32 to vector<1x128xf32>
    %74 = arith.addf %72, %73 : vector<1x128xf32>
    %c0_36 = arith.constant 0 : index
    %c0_37 = arith.constant 0 : index
    %c0_38 = arith.constant 0 : index
    %75 = vector.load %arg6[%c0_36, %c0_37, %c0_38] : memref<9x1x128xf32, #tpu.memory_space<vmem>>, vector<1x1x128xf32>
    %76 = vector.shape_cast %75 : vector<1x1x128xf32> to vector<1x128xf32>
    %77 = vector.shape_cast %74 : vector<1x128xf32> to vector<1x1x128xf32>
    tpu.vector_store %arg6[%c0_36, %c0_37, %c0_38], %77 {strides = array<i32>} : memref<9x1x128xf32, #tpu.memory_space<vmem>>, vector<1x1x128xf32>,
    %c1_39 = arith.constant 1 : index
    %78 = memref.load %arg5[%c1_39] : memref<9xf32, #tpu.memory_space<smem>>
    %c1_40 = arith.constant 1 : index
    %c0_41 = arith.constant 0 : index
    %79 = memref.load %arg4[%c1_40, %c0_41] : memref<9x4xf32, #tpu.memory_space<smem>>
    %80 = vector.broadcast %79 : f32 to vector<1x128xf32>
    %81 = arith.mulf %80, %15 : vector<1x128xf32>
    %82 = vector.broadcast %78 : f32 to vector<1x128xf32>
    %83 = arith.addf %82, %81 : vector<1x128xf32>
    %c1_42 = arith.constant 1 : index
    %c1_43 = arith.constant 1 : index
    %84 = memref.load %arg4[%c1_42, %c1_43] : memref<9x4xf32, #tpu.memory_space<smem>>
    %85 = vector.broadcast %84 : f32 to vector<1x128xf32>
    %86 = arith.mulf %85, %27 : vector<1x128xf32>
    %87 = arith.addf %83, %86 : vector<1x128xf32>
    %c1_44 = arith.constant 1 : index
    %c2_45 = arith.constant 2 : index
    %88 = memref.load %arg4[%c1_44, %c2_45] : memref<9x4xf32, #tpu.memory_space<smem>>
    %89 = vector.broadcast %88 : f32 to vector<1x128xf32>
    %90 = arith.mulf %89, %39 : vector<1x128xf32>
    %91 = arith.addf %87, %90 : vector<1x128xf32>
    %c1_46 = arith.constant 1 : index
    %c3_47 = arith.constant 3 : index
    %92 = memref.load %arg4[%c1_46, %c3_47] : memref<9x4xf32, #tpu.memory_space<smem>>
    %93 = vector.broadcast %92 : f32 to vector<1x128xf32>
    %94 = arith.mulf %93, %51 : vector<1x128xf32>
    %95 = arith.addf %91, %94 : vector<1x128xf32>
    %96 = math.tanh %95 : vector<1x128xf32>
    %cst_48 = arith.constant 5.000000e-01 : f32
    %97 = vector.broadcast %cst_48 : f32 to vector<1x128xf32>
    %98 = arith.mulf %97, %96 : vector<1x128xf32>
    %cst_49 = arith.constant 5.000000e-01 : f32
    %99 = vector.broadcast %cst_49 : f32 to vector<1x128xf32>
    %100 = arith.addf %98, %99 : vector<1x128xf32>
    %c1_50 = arith.constant 1 : index
    %c0_51 = arith.constant 0 : index
    %c0_52 = arith.constant 0 : index
    %101 = vector.load %arg6[%c1_50, %c0_51, %c0_52] : memref<9x1x128xf32, #tpu.memory_space<vmem>>, vector<1x1x128xf32>
    %102 = vector.shape_cast %101 : vector<1x1x128xf32> to vector<1x128xf32>
    %103 = vector.shape_cast %100 : vector<1x128xf32> to vector<1x1x128xf32>
    tpu.vector_store %arg6[%c1_50, %c0_51, %c0_52], %103 {strides = array<i32>} : memref<9x1x128xf32, #tpu.memory_space<vmem>>, vector<1x1x128xf32>,
    %c2_53 = arith.constant 2 : index
    %104 = memref.load %arg5[%c2_53] : memref<9xf32, #tpu.memory_space<smem>>
    %c2_54 = arith.constant 2 : index
    %c0_55 = arith.constant 0 : index
    %105 = memref.load %arg4[%c2_54, %c0_55] : memref<9x4xf32, #tpu.memory_space<smem>>
    %106 = vector.broadcast %105 : f32 to vector<1x128xf32>
    %107 = arith.mulf %106, %15 : vector<1x128xf32>
    %108 = vector.broadcast %104 : f32 to vector<1x128xf32>
    %109 = arith.addf %108, %107 : vector<1x128xf32>
    %c2_56 = arith.constant 2 : index
    %c1_57 = arith.constant 1 : index
    %110 = memref.load %arg4[%c2_56, %c1_57] : memref<9x4xf32, #tpu.memory_space<smem>>
    %111 = vector.broadcast %110 : f32 to vector<1x128xf32>
    %112 = arith.mulf %111, %27 : vector<1x128xf32>
    %113 = arith.addf %109, %112 : vector<1x128xf32>
    %c2_58 = arith.constant 2 : index
    %c2_59 = arith.constant 2 : index
    %114 = memref.load %arg4[%c2_58, %c2_59] : memref<9x4xf32, #tpu.memory_space<smem>>
    %115 = vector.broadcast %114 : f32 to vector<1x128xf32>
    %116 = arith.mulf %115, %39 : vector<1x128xf32>
    %117 = arith.addf %113, %116 : vector<1x128xf32>
    %c2_60 = arith.constant 2 : index
    %c3_61 = arith.constant 3 : index
    %118 = memref.load %arg4[%c2_60, %c3_61] : memref<9x4xf32, #tpu.memory_space<smem>>
    %119 = vector.broadcast %118 : f32 to vector<1x128xf32>
    %120 = arith.mulf %119, %51 : vector<1x128xf32>
    %121 = arith.addf %117, %120 : vector<1x128xf32>
    %122 = math.tanh %121 : vector<1x128xf32>
    %cst_62 = arith.constant 5.000000e-01 : f32
    %123 = vector.broadcast %cst_62 : f32 to vector<1x128xf32>
    %124 = arith.mulf %123, %122 : vector<1x128xf32>
    %cst_63 = arith.constant 5.000000e-01 : f32
    %125 = vector.broadcast %cst_63 : f32 to vector<1x128xf32>
    %126 = arith.addf %124, %125 : vector<1x128xf32>
    %c2_64 = arith.constant 2 : index
    %c0_65 = arith.constant 0 : index
    %c0_66 = arith.constant 0 : index
    %127 = vector.load %arg6[%c2_64, %c0_65, %c0_66] : memref<9x1x128xf32, #tpu.memory_space<vmem>>, vector<1x1x128xf32>
    %128 = vector.shape_cast %127 : vector<1x1x128xf32> to vector<1x128xf32>
    %129 = vector.shape_cast %126 : vector<1x128xf32> to vector<1x1x128xf32>
    tpu.vector_store %arg6[%c2_64, %c0_65, %c0_66], %129 {strides = array<i32>} : memref<9x1x128xf32, #tpu.memory_space<vmem>>, vector<1x1x128xf32>,
    %c3_67 = arith.constant 3 : index
    %130 = memref.load %arg5[%c3_67] : memref<9xf32, #tpu.memory_space<smem>>
    %c3_68 = arith.constant 3 : index
    %c0_69 = arith.constant 0 : index
    %131 = memref.load %arg4[%c3_68, %c0_69] : memref<9x4xf32, #tpu.memory_space<smem>>
    %132 = vector.broadcast %131 : f32 to vector<1x128xf32>
    %133 = arith.mulf %132, %15 : vector<1x128xf32>
    %134 = vector.broadcast %130 : f32 to vector<1x128xf32>
    %135 = arith.addf %134, %133 : vector<1x128xf32>
    %c3_70 = arith.constant 3 : index
    %c1_71 = arith.constant 1 : index
    %136 = memref.load %arg4[%c3_70, %c1_71] : memref<9x4xf32, #tpu.memory_space<smem>>
    %137 = vector.broadcast %136 : f32 to vector<1x128xf32>
    %138 = arith.mulf %137, %27 : vector<1x128xf32>
    %139 = arith.addf %135, %138 : vector<1x128xf32>
    %c3_72 = arith.constant 3 : index
    %c2_73 = arith.constant 2 : index
    %140 = memref.load %arg4[%c3_72, %c2_73] : memref<9x4xf32, #tpu.memory_space<smem>>
    %141 = vector.broadcast %140 : f32 to vector<1x128xf32>
    %142 = arith.mulf %141, %39 : vector<1x128xf32>
    %143 = arith.addf %139, %142 : vector<1x128xf32>
    %c3_74 = arith.constant 3 : index
    %c3_75 = arith.constant 3 : index
    %144 = memref.load %arg4[%c3_74, %c3_75] : memref<9x4xf32, #tpu.memory_space<smem>>
    %145 = vector.broadcast %144 : f32 to vector<1x128xf32>
    %146 = arith.mulf %145, %51 : vector<1x128xf32>
    %147 = arith.addf %143, %146 : vector<1x128xf32>
    %148 = math.tanh %147 : vector<1x128xf32>
    %cst_76 = arith.constant 5.000000e-01 : f32
    %149 = vector.broadcast %cst_76 : f32 to vector<1x128xf32>
    %150 = arith.mulf %149, %148 : vector<1x128xf32>
    %cst_77 = arith.constant 5.000000e-01 : f32
    %151 = vector.broadcast %cst_77 : f32 to vector<1x128xf32>
    %152 = arith.addf %150, %151 : vector<1x128xf32>
    %c3_78 = arith.constant 3 : index
    %c0_79 = arith.constant 0 : index
    %c0_80 = arith.constant 0 : index
    %153 = vector.load %arg6[%c3_78, %c0_79, %c0_80] : memref<9x1x128xf32, #tpu.memory_space<vmem>>, vector<1x1x128xf32>
    %154 = vector.shape_cast %153 : vector<1x1x128xf32> to vector<1x128xf32>
    %155 = vector.shape_cast %152 : vector<1x128xf32> to vector<1x1x128xf32>
    tpu.vector_store %arg6[%c3_78, %c0_79, %c0_80], %155 {strides = array<i32>} : memref<9x1x128xf32, #tpu.memory_space<vmem>>, vector<1x1x128xf32>,
    %c4 = arith.constant 4 : index
    %156 = memref.load %arg5[%c4] : memref<9xf32, #tpu.memory_space<smem>>
    %c4_81 = arith.constant 4 : index
    %c0_82 = arith.constant 0 : index
    %157 = memref.load %arg4[%c4_81, %c0_82] : memref<9x4xf32, #tpu.memory_space<smem>>
    %158 = vector.broadcast %157 : f32 to vector<1x128xf32>
    %159 = arith.mulf %158, %15 : vector<1x128xf32>
    %160 = vector.broadcast %156 : f32 to vector<1x128xf32>
    %161 = arith.addf %160, %159 : vector<1x128xf32>
    %c4_83 = arith.constant 4 : index
    %c1_84 = arith.constant 1 : index
    %162 = memref.load %arg4[%c4_83, %c1_84] : memref<9x4xf32, #tpu.memory_space<smem>>
    %163 = vector.broadcast %162 : f32 to vector<1x128xf32>
    %164 = arith.mulf %163, %27 : vector<1x128xf32>
    %165 = arith.addf %161, %164 : vector<1x128xf32>
    %c4_85 = arith.constant 4 : index
    %c2_86 = arith.constant 2 : index
    %166 = memref.load %arg4[%c4_85, %c2_86] : memref<9x4xf32, #tpu.memory_space<smem>>
    %167 = vector.broadcast %166 : f32 to vector<1x128xf32>
    %168 = arith.mulf %167, %39 : vector<1x128xf32>
    %169 = arith.addf %165, %168 : vector<1x128xf32>
    %c4_87 = arith.constant 4 : index
    %c3_88 = arith.constant 3 : index
    %170 = memref.load %arg4[%c4_87, %c3_88] : memref<9x4xf32, #tpu.memory_space<smem>>
    %171 = vector.broadcast %170 : f32 to vector<1x128xf32>
    %172 = arith.mulf %171, %51 : vector<1x128xf32>
    %173 = arith.addf %169, %172 : vector<1x128xf32>
    %174 = math.tanh %173 : vector<1x128xf32>
    %cst_89 = arith.constant 5.000000e-01 : f32
    %175 = vector.broadcast %cst_89 : f32 to vector<1x128xf32>
    %176 = arith.mulf %175, %174 : vector<1x128xf32>
    %cst_90 = arith.constant 5.000000e-01 : f32
    %177 = vector.broadcast %cst_90 : f32 to vector<1x128xf32>
    %178 = arith.addf %176, %177 : vector<1x128xf32>
    %c4_91 = arith.constant 4 : index
    %c0_92 = arith.constant 0 : index
    %c0_93 = arith.constant 0 : index
    %179 = vector.load %arg6[%c4_91, %c0_92, %c0_93] : memref<9x1x128xf32, #tpu.memory_space<vmem>>, vector<1x1x128xf32>
    %180 = vector.shape_cast %179 : vector<1x1x128xf32> to vector<1x128xf32>
    %181 = vector.shape_cast %178 : vector<1x128xf32> to vector<1x1x128xf32>
    tpu.vector_store %arg6[%c4_91, %c0_92, %c0_93], %181 {strides = array<i32>} : memref<9x1x128xf32, #tpu.memory_space<vmem>>, vector<1x1x128xf32>,
    %c5 = arith.constant 5 : index
    %182 = memref.load %arg5[%c5] : memref<9xf32, #tpu.memory_space<smem>>
    %c5_94 = arith.constant 5 : index
    %c0_95 = arith.constant 0 : index
    %183 = memref.load %arg4[%c5_94, %c0_95] : memref<9x4xf32, #tpu.memory_space<smem>>
    %184 = vector.broadcast %183 : f32 to vector<1x128xf32>
    %185 = arith.mulf %184, %15 : vector<1x128xf32>
    %186 = vector.broadcast %182 : f32 to vector<1x128xf32>
    %187 = arith.addf %186, %185 : vector<1x128xf32>
    %c5_96 = arith.constant 5 : index
    %c1_97 = arith.constant 1 : index
    %188 = memref.load %arg4[%c5_96, %c1_97] : memref<9x4xf32, #tpu.memory_space<smem>>
    %189 = vector.broadcast %188 : f32 to vector<1x128xf32>
    %190 = arith.mulf %189, %27 : vector<1x128xf32>
    %191 = arith.addf %187, %190 : vector<1x128xf32>
    %c5_98 = arith.constant 5 : index
    %c2_99 = arith.constant 2 : index
    %192 = memref.load %arg4[%c5_98, %c2_99] : memref<9x4xf32, #tpu.memory_space<smem>>
    %193 = vector.broadcast %192 : f32 to vector<1x128xf32>
    %194 = arith.mulf %193, %39 : vector<1x128xf32>
    %195 = arith.addf %191, %194 : vector<1x128xf32>
    %c5_100 = arith.constant 5 : index
    %c3_101 = arith.constant 3 : index
    %196 = memref.load %arg4[%c5_100, %c3_101] : memref<9x4xf32, #tpu.memory_space<smem>>
    %197 = vector.broadcast %196 : f32 to vector<1x128xf32>
    %198 = arith.mulf %197, %51 : vector<1x128xf32>
    %199 = arith.addf %195, %198 : vector<1x128xf32>
    %200 = math.tanh %199 : vector<1x128xf32>
    %cst_102 = arith.constant 5.000000e-01 : f32
    %201 = vector.broadcast %cst_102 : f32 to vector<1x128xf32>
    %202 = arith.mulf %201, %200 : vector<1x128xf32>
    %cst_103 = arith.constant 5.000000e-01 : f32
    %203 = vector.broadcast %cst_103 : f32 to vector<1x128xf32>
    %204 = arith.addf %202, %203 : vector<1x128xf32>
    %c5_104 = arith.constant 5 : index
    %c0_105 = arith.constant 0 : index
    %c0_106 = arith.constant 0 : index
    %205 = vector.load %arg6[%c5_104, %c0_105, %c0_106] : memref<9x1x128xf32, #tpu.memory_space<vmem>>, vector<1x1x128xf32>
    %206 = vector.shape_cast %205 : vector<1x1x128xf32> to vector<1x128xf32>
    %207 = vector.shape_cast %204 : vector<1x128xf32> to vector<1x1x128xf32>
    tpu.vector_store %arg6[%c5_104, %c0_105, %c0_106], %207 {strides = array<i32>} : memref<9x1x128xf32, #tpu.memory_space<vmem>>, vector<1x1x128xf32>,
    %c6 = arith.constant 6 : index
    %208 = memref.load %arg5[%c6] : memref<9xf32, #tpu.memory_space<smem>>
    %c6_107 = arith.constant 6 : index
    %c0_108 = arith.constant 0 : index
    %209 = memref.load %arg4[%c6_107, %c0_108] : memref<9x4xf32, #tpu.memory_space<smem>>
    %210 = vector.broadcast %209 : f32 to vector<1x128xf32>
    %211 = arith.mulf %210, %15 : vector<1x128xf32>
    %212 = vector.broadcast %208 : f32 to vector<1x128xf32>
    %213 = arith.addf %212, %211 : vector<1x128xf32>
    %c6_109 = arith.constant 6 : index
    %c1_110 = arith.constant 1 : index
    %214 = memref.load %arg4[%c6_109, %c1_110] : memref<9x4xf32, #tpu.memory_space<smem>>
    %215 = vector.broadcast %214 : f32 to vector<1x128xf32>
    %216 = arith.mulf %215, %27 : vector<1x128xf32>
    %217 = arith.addf %213, %216 : vector<1x128xf32>
    %c6_111 = arith.constant 6 : index
    %c2_112 = arith.constant 2 : index
    %218 = memref.load %arg4[%c6_111, %c2_112] : memref<9x4xf32, #tpu.memory_space<smem>>
    %219 = vector.broadcast %218 : f32 to vector<1x128xf32>
    %220 = arith.mulf %219, %39 : vector<1x128xf32>
    %221 = arith.addf %217, %220 : vector<1x128xf32>
    %c6_113 = arith.constant 6 : index
    %c3_114 = arith.constant 3 : index
    %222 = memref.load %arg4[%c6_113, %c3_114] : memref<9x4xf32, #tpu.memory_space<smem>>
    %223 = vector.broadcast %222 : f32 to vector<1x128xf32>
    %224 = arith.mulf %223, %51 : vector<1x128xf32>
    %225 = arith.addf %221, %224 : vector<1x128xf32>
    %226 = math.tanh %225 : vector<1x128xf32>
    %cst_115 = arith.constant 5.000000e-01 : f32
    %227 = vector.broadcast %cst_115 : f32 to vector<1x128xf32>
    %228 = arith.mulf %227, %226 : vector<1x128xf32>
    %cst_116 = arith.constant 5.000000e-01 : f32
    %229 = vector.broadcast %cst_116 : f32 to vector<1x128xf32>
    %230 = arith.addf %228, %229 : vector<1x128xf32>
    %c6_117 = arith.constant 6 : index
    %c0_118 = arith.constant 0 : index
    %c0_119 = arith.constant 0 : index
    %231 = vector.load %arg6[%c6_117, %c0_118, %c0_119] : memref<9x1x128xf32, #tpu.memory_space<vmem>>, vector<1x1x128xf32>
    %232 = vector.shape_cast %231 : vector<1x1x128xf32> to vector<1x128xf32>
    %233 = vector.shape_cast %230 : vector<1x128xf32> to vector<1x1x128xf32>
    tpu.vector_store %arg6[%c6_117, %c0_118, %c0_119], %233 {strides = array<i32>} : memref<9x1x128xf32, #tpu.memory_space<vmem>>, vector<1x1x128xf32>,
    %c7 = arith.constant 7 : index
    %234 = memref.load %arg5[%c7] : memref<9xf32, #tpu.memory_space<smem>>
    %c7_120 = arith.constant 7 : index
    %c0_121 = arith.constant 0 : index
    %235 = memref.load %arg4[%c7_120, %c0_121] : memref<9x4xf32, #tpu.memory_space<smem>>
    %236 = vector.broadcast %235 : f32 to vector<1x128xf32>
    %237 = arith.mulf %236, %15 : vector<1x128xf32>
    %238 = vector.broadcast %234 : f32 to vector<1x128xf32>
    %239 = arith.addf %238, %237 : vector<1x128xf32>
    %c7_122 = arith.constant 7 : index
    %c1_123 = arith.constant 1 : index
    %240 = memref.load %arg4[%c7_122, %c1_123] : memref<9x4xf32, #tpu.memory_space<smem>>
    %241 = vector.broadcast %240 : f32 to vector<1x128xf32>
    %242 = arith.mulf %241, %27 : vector<1x128xf32>
    %243 = arith.addf %239, %242 : vector<1x128xf32>
    %c7_124 = arith.constant 7 : index
    %c2_125 = arith.constant 2 : index
    %244 = memref.load %arg4[%c7_124, %c2_125] : memref<9x4xf32, #tpu.memory_space<smem>>
    %245 = vector.broadcast %244 : f32 to vector<1x128xf32>
    %246 = arith.mulf %245, %39 : vector<1x128xf32>
    %247 = arith.addf %243, %246 : vector<1x128xf32>
    %c7_126 = arith.constant 7 : index
    %c3_127 = arith.constant 3 : index
    %248 = memref.load %arg4[%c7_126, %c3_127] : memref<9x4xf32, #tpu.memory_space<smem>>
    %249 = vector.broadcast %248 : f32 to vector<1x128xf32>
    %250 = arith.mulf %249, %51 : vector<1x128xf32>
    %251 = arith.addf %247, %250 : vector<1x128xf32>
    %252 = math.tanh %251 : vector<1x128xf32>
    %cst_128 = arith.constant 5.000000e-01 : f32
    %253 = vector.broadcast %cst_128 : f32 to vector<1x128xf32>
    %254 = arith.mulf %253, %252 : vector<1x128xf32>
    %cst_129 = arith.constant 5.000000e-01 : f32
    %255 = vector.broadcast %cst_129 : f32 to vector<1x128xf32>
    %256 = arith.addf %254, %255 : vector<1x128xf32>
    %c7_130 = arith.constant 7 : index
    %c0_131 = arith.constant 0 : index
    %c0_132 = arith.constant 0 : index
    %257 = vector.load %arg6[%c7_130, %c0_131, %c0_132] : memref<9x1x128xf32, #tpu.memory_space<vmem>>, vector<1x1x128xf32>
    %258 = vector.shape_cast %257 : vector<1x1x128xf32> to vector<1x128xf32>
    %259 = vector.shape_cast %256 : vector<1x128xf32> to vector<1x1x128xf32>
    tpu.vector_store %arg6[%c7_130, %c0_131, %c0_132], %259 {strides = array<i32>} : memref<9x1x128xf32, #tpu.memory_space<vmem>>, vector<1x1x128xf32>,
    %c8 = arith.constant 8 : index
    %260 = memref.load %arg5[%c8] : memref<9xf32, #tpu.memory_space<smem>>
    %c8_133 = arith.constant 8 : index
    %c0_134 = arith.constant 0 : index
    %261 = memref.load %arg4[%c8_133, %c0_134] : memref<9x4xf32, #tpu.memory_space<smem>>
    %262 = vector.broadcast %261 : f32 to vector<1x128xf32>
    %263 = arith.mulf %262, %15 : vector<1x128xf32>
    %264 = vector.broadcast %260 : f32 to vector<1x128xf32>
    %265 = arith.addf %264, %263 : vector<1x128xf32>
    %c8_135 = arith.constant 8 : index
    %c1_136 = arith.constant 1 : index
    %266 = memref.load %arg4[%c8_135, %c1_136] : memref<9x4xf32, #tpu.memory_space<smem>>
    %267 = vector.broadcast %266 : f32 to vector<1x128xf32>
    %268 = arith.mulf %267, %27 : vector<1x128xf32>
    %269 = arith.addf %265, %268 : vector<1x128xf32>
    %c8_137 = arith.constant 8 : index
    %c2_138 = arith.constant 2 : index
    %270 = memref.load %arg4[%c8_137, %c2_138] : memref<9x4xf32, #tpu.memory_space<smem>>
    %271 = vector.broadcast %270 : f32 to vector<1x128xf32>
    %272 = arith.mulf %271, %39 : vector<1x128xf32>
    %273 = arith.addf %269, %272 : vector<1x128xf32>
    %c8_139 = arith.constant 8 : index
    %c3_140 = arith.constant 3 : index
    %274 = memref.load %arg4[%c8_139, %c3_140] : memref<9x4xf32, #tpu.memory_space<smem>>
    %275 = vector.broadcast %274 : f32 to vector<1x128xf32>
    %276 = arith.mulf %275, %51 : vector<1x128xf32>
    %277 = arith.addf %273, %276 : vector<1x128xf32>
    %278 = math.tanh %277 : vector<1x128xf32>
    %cst_141 = arith.constant 5.000000e-01 : f32
    %279 = vector.broadcast %cst_141 : f32 to vector<1x128xf32>
    %280 = arith.mulf %279, %278 : vector<1x128xf32>
    %cst_142 = arith.constant 5.000000e-01 : f32
    %281 = vector.broadcast %cst_142 : f32 to vector<1x128xf32>
    %282 = arith.addf %280, %281 : vector<1x128xf32>
    %c8_143 = arith.constant 8 : index
    %c0_144 = arith.constant 0 : index
    %c0_145 = arith.constant 0 : index
    %283 = vector.load %arg6[%c8_143, %c0_144, %c0_145] : memref<9x1x128xf32, #tpu.memory_space<vmem>>, vector<1x1x128xf32>
    %284 = vector.shape_cast %283 : vector<1x1x128xf32> to vector<1x128xf32>
    %285 = vector.shape_cast %282 : vector<1x128xf32> to vector<1x1x128xf32>
    tpu.vector_store %arg6[%c8_143, %c0_144, %c0_145], %285 {strides = array<i32>} : memref<9x1x128xf32, #tpu.memory_space<vmem>>, vector<1x1x128xf32>,
    return
  }
  func.func @transform_0(%arg0: i32) -> (i32, i32, i32) {
    %c0_i32 = arith.constant 0 : i32
    %c0_i32_0 = arith.constant 0 : i32
    %c0_i32_1 = arith.constant 0 : i32
    return %c0_i32, %arg0, %c0_i32_0 : i32, i32, i32
  }
  func.func @transform_1(%arg0: i32) -> (i32, i32) {
    %c0_i32 = arith.constant 0 : i32
    %c0_i32_0 = arith.constant 0 : i32
    %c0_i32_1 = arith.constant 0 : i32
    return %c0_i32, %c0_i32_0 : i32, i32
  }
  func.func @transform_2(%arg0: i32) -> i32 {
    %c0_i32 = arith.constant 0 : i32
    %c0_i32_0 = arith.constant 0 : i32
    return %c0_i32 : i32
  }
  func.func @transform_3(%arg0: i32) -> (i32, i32) {
    %c0_i32 = arith.constant 0 : i32
    %c0_i32_0 = arith.constant 0 : i32
    %c0_i32_1 = arith.constant 0 : i32
    return %c0_i32, %c0_i32_0 : i32, i32
  }
  func.func @transform_4(%arg0: i32) -> i32 {
    %c0_i32 = arith.constant 0 : i32
    %c0_i32_0 = arith.constant 0 : i32
    return %c0_i32 : i32
  }
  func.func @transform_5(%arg0: i32) -> (i32, i32, i32) {
    %c0_i32 = arith.constant 0 : i32
    %c0_i32_0 = arith.constant 0 : i32
    %c0_i32_1 = arith.constant 0 : i32
    return %c0_i32, %arg0, %c0_i32_0 : i32, i32, i32
  }
}

</mosaic_0001>

<llo_original>
// kernel: tpu_custom_call.1
$region0: #{tpu_custom_call.1}
  #allocation0 [shape = 'u32[]', space=smem, size = 0x4, offset = 0x4, fixed_abs, tag = 'smem constant byte address 0x4 - core index']
  #allocation1 [shape = 'u32[144,128]{1,0:T(1,128)}', space=vmem, size = 0x12000, scoped, tag = 'internal scratch']
  %s0 = inlined_call_operand.vmem [shape: f32[2,1,128], index: 0, kind: input, shape index: {}]
  %s1 = inlined_call_operand.vmem [shape: f32[4,2], index: 1, kind: input, shape index: {}]
  %s2 = inlined_call_operand.vmem [shape: f32[4], index: 2, kind: input, shape index: {}]
  %s3 = inlined_call_operand.vmem [shape: f32[9,4], index: 3, kind: input, shape index: {}]
  %s4 = inlined_call_operand.vmem [shape: f32[9], index: 4, kind: input, shape index: {}]
  %s5 = inlined_call_operand.hbm [shape: f32[9,1,128], index: 5, kind: output, shape index: {}]
  %s6 = sld [smem:[#allocation0]]
  $region46: #{tpu_custom_call.1} parent=0
    _
  %s8 = ssub.s32 1, %s6
  %s9 = scalar_select 0, %s8, %s6
  $region1: #{tpu_custom_call.1} parent=0
    #allocation2 [shape = 'u8[2048]{0}', space=smem, size = 0x800, scoped, tag = 'input window, operand 1, single buffered']
    #allocation3 [shape = 's32[1]{0}', space=sflag, size = 0x4, scoped, tag = 'scoped memory for tpu_custom_call.1']
    #allocation4 [shape = 's32[1]{0}', space=sflag, size = 0x4, scoped, tag = 'scoped memory for tpu_custom_call.1']
    #allocation5 [shape = 'u8[512]{0}', space=smem, size = 0x200, scoped, tag = 'input window, operand 2, single buffered']
    #allocation6 [shape = 's32[1]{0}', space=sflag, size = 0x4, scoped, tag = 'scoped memory for tpu_custom_call.1']
    #allocation7 [shape = 'u8[8192]{0}', space=smem, size = 0x2000, scoped, tag = 'input window, operand 3, single buffered']
    #allocation8 [shape = 'u8[512]{0}', space=smem, size = 0x200, scoped, tag = 'input window, operand 4, single buffered']
    #allocation9 [shape = 's32[1]{0}', space=sflag, size = 0x4, scoped, tag = 'scoped memory for tpu_custom_call.1']
    #allocation10 [shape = 'u8[4608]{0}', space=vmem, size = 0x1400, scoped, tag = 'output window, operand 0, single buffered']
    %10 = vsyncpa [#allocation4], 0
    %11 = vsyncpa [#allocation6], 0
    %12 = vsyncpa [#allocation9], 0
    %13 = vsyncpa [#allocation3], 0
    // Predicated region
    $region2: #{tpu_custom_call.1} parent=1 // pred_check
      _
    $region3: #{tpu_custom_call.1} parent=1 // pred_check_branch
      %15 = sbr.rel (0) target = $region5
    $region4: #{tpu_custom_call.1} parent=1 // pred_region
      _
    $region5: #{tpu_custom_call.1} parent=1 // pred_fallthru
      _
    // Predicated region
    $region6: #{tpu_custom_call.1} parent=1 // pred_check
      _
    $region7: #{tpu_custom_call.1} parent=1 // pred_check_branch
      %17 = sbr.rel (0) target = $region9
    $region8: #{tpu_custom_call.1} parent=1 // pred_region
      %s19 = ssub.s32 64, 64
      %20 = vsyncadd [#allocation4], %s19
      %s22 = sshll.u32 %s1, 4
      %s23 = int_to_ptr.vmem [resolvable:$true] %s22
      %25 = dma.vmem_to_smem %s23, 64, [#allocation2], [#allocation4]
    $region9: #{tpu_custom_call.1} parent=1 // pred_fallthru
      _
    // Predicated region
    $region10: #{tpu_custom_call.1} parent=1 // pred_check
      _
    $region11: #{tpu_custom_call.1} parent=1 // pred_check_branch
      %27 = sbr.rel (0) target = $region13
    $region12: #{tpu_custom_call.1} parent=1 // pred_region
      %s29 = ssub.s32 16, 16
      %30 = vsyncadd [#allocation6], %s29
      %s32 = sshll.u32 %s2, 4
      %s33 = int_to_ptr.vmem [resolvable:$true] %s32
      %35 = dma.vmem_to_smem %s33, 16, [#allocation5], [#allocation6]
    $region13: #{tpu_custom_call.1} parent=1 // pred_fallthru
      _
    // Predicated region
    $region14: #{tpu_custom_call.1} parent=1 // pred_check
      _
    $region15: #{tpu_custom_call.1} parent=1 // pred_check_branch
      %37 = sbr.rel (0) target = $region17
    $region16: #{tpu_custom_call.1} parent=1 // pred_region
      %s39 = ssub.s32 256, 256
      %40 = vsyncadd [#allocation6], %s39
      %s41 = sshll.u32 %s3, 4
      %s42 = int_to_ptr.vmem [resolvable:$true] %s41
      %47 = dma.vmem_to_smem %s42, 256, [#allocation7], [#allocation6], 128, 128, 8
    $region17: #{tpu_custom_call.1} parent=1 // pred_fallthru
      _
    // Predicated region
    $region18: #{tpu_custom_call.1} parent=1 // pred_check
      _
    $region19: #{tpu_custom_call.1} parent=1 // pred_check_branch
      %49 = sbr.rel (0) target = $region21
    $region20: #{tpu_custom_call.1} parent=1 // pred_region
      %s51 = ssub.s32 16, 16
      %52 = vsyncadd [#allocation9], %s51
      %s54 = sshll.u32 %s4, 4
      %s55 = int_to_ptr.vmem [resolvable:$true] %s54
      %57 = dma.vmem_to_smem %s55, 16, [#allocation8], [#allocation9]
    $region21: #{tpu_custom_call.1} parent=1 // pred_fallthru
      _
    // Predicated region
    $region22: #{tpu_custom_call.1} parent=1 // pred_check
      _
    $region23: #{tpu_custom_call.1} parent=1 // pred_check_branch
      %59 = sbr.rel (0) target = $region25
    $region24: #{tpu_custom_call.1} parent=1 // pred_region
      %60 = dma.done [#allocation4], 64
    $region25: #{tpu_custom_call.1} parent=1 // pred_fallthru
      _
    // Predicated region
    $region26: #{tpu_custom_call.1} parent=1 // pred_check
      _
    $region27: #{tpu_custom_call.1} parent=1 // pred_check_branch
      %62 = sbr.rel (0) target = $region29
    $region28: #{tpu_custom_call.1} parent=1 // pred_region
      %63 = dma.done [#allocation6], 16
    $region29: #{tpu_custom_call.1} parent=1 // pred_fallthru
      _
    // Predicated region
    $region30: #{tpu_custom_call.1} parent=1 // pred_check
      _
    $region31: #{tpu_custom_call.1} parent=1 // pred_check_branch
      %65 = sbr.rel (0) target = $region33
    $region32: #{tpu_custom_call.1} parent=1 // pred_region
      %66 = dma.done [#allocation6], 256
    $region33: #{tpu_custom_call.1} parent=1 // pred_fallthru
      _
    // Predicated region
    $region34: #{tpu_custom_call.1} parent=1 // pred_check
      _
    $region35: #{tpu_custom_call.1} parent=1 // pred_check_branch
      %68 = sbr.rel (0) target = $region37
    $region36: #{tpu_custom_call.1} parent=1 // pred_region
      %69 = dma.done [#allocation9], 16
    $region37: #{tpu_custom_call.1} parent=1 // pred_fallthru
      _
    %70 = sfence
    %v71 = vld [vmem:[%s0] sm:$0x1]
    %s72 = scalar_lea.vmem %s0, 1
    %v73 = vld [vmem:[%s72] sm:$0x1]
    %s74 = sld [smem:[#allocation5]]
    %s75 = sld [smem:[#allocation2]]
    %v76 = vstv %s75
    %v77 = vmul.f32 %v76, %v71
    %v78 = vstv %s74
    %v79 = vadd.f32 %v78, %v77
    %s80 = sld [smem:[#allocation2 + $0x1]]
    %v81 = vstv %s80
    %v82 = vmul.f32 %v81, %v73
    %v83 = vadd.f32 %v79, %v82
    %v84 = vmax.f32 %v83, 0.0
    %s85 = sld [smem:[#allocation5 + $0x1]]
    %s86 = sld [smem:[#allocation2 + $0x80]]
    %v87 = vstv %s86
    %v88 = vmul.f32 %v87, %v71
    %v89 = vstv %s85
    %v90 = vadd.f32 %v89, %v88
    %s91 = sld [smem:[#allocation2 + $0x81]]
    %v92 = vstv %s91
    %v93 = vmul.f32 %v92, %v73
    %v94 = vadd.f32 %v90, %v93
    %v95 = vmax.f32 %v94, 0.0
    %s96 = sld [smem:[#allocation5 + $0x2]]
    %s97 = sld [smem:[#allocation2 + $0x100]]
    %v98 = vstv %s97
    %v99 = vmul.f32 %v98, %v71
    %v100 = vstv %s96
    %v101 = vadd.f32 %v100, %v99
    %s102 = sld [smem:[#allocation2 + $0x101]]
    %v103 = vstv %s102
    %v104 = vmul.f32 %v103, %v73
    %v105 = vadd.f32 %v101, %v104
    %v106 = vmax.f32 %v105, 0.0
    %s107 = sld [smem:[#allocation5 + $0x3]]
    %s108 = sld [smem:[#allocation2 + $0x180]]
    %v109 = vstv %s108
    %v110 = vmul.f32 %v109, %v71
    %v111 = vstv %s107
    %v112 = vadd.f32 %v111, %v110
    %s113 = sld [smem:[#allocation2 + $0x181]]
    %v114 = vstv %s113
    %v115 = vmul.f32 %v114, %v73
    %v116 = vadd.f32 %v112, %v115
    %v117 = vmax.f32 %v116, 0.0
    %s118 = sld [smem:[#allocation8]]
    %s119 = sld [smem:[#allocation7]]
    %v120 = vstv %s119
    %v121 = vmul.f32 %v120, %v84
    %v122 = vstv %s118
    %v123 = vadd.f32 %v122, %v121
    %s124 = sld [smem:[#allocation7 + $0x1]]
    %v125 = vstv %s124
    %v126 = vmul.f32 %v125, %v95
    %v127 = vadd.f32 %v123, %v126
    %s128 = sld [smem:[#allocation7 + $0x2]]
    %v129 = vstv %s128
    %v130 = vmul.f32 %v129, %v106
    %v131 = vadd.f32 %v127, %v130
    %s132 = sld [smem:[#allocation7 + $0x3]]
    %v133 = vstv %s132
    %v134 = vmul.f32 %v133, %v117
    %v135 = vadd.f32 %v131, %v134
    %v136 = vtanh.pop %v135
    %v137 = vmul.f32 %v136, 0.5
    %v138 = vadd.f32 %v137, 0.5
    %139 = vst [vmem:[#allocation10] sm:$0x1] %v138
    %s140 = sld [smem:[#allocation8 + $0x1]]
    %s141 = sld [smem:[#allocation7 + $0x80]]
    %v142 = vstv %s141
    %v143 = vmul.f32 %v142, %v84
    %v144 = vstv %s140
    %v145 = vadd.f32 %v144, %v143
    %s146 = sld [smem:[#allocation7 + $0x81]]
    %v147 = vstv %s146
    %v148 = vmul.f32 %v147, %v95
    %v149 = vadd.f32 %v145, %v148
    %s150 = sld [smem:[#allocation7 + $0x82]]
    %v151 = vstv %s150
    %v152 = vmul.f32 %v151, %v106
    %v153 = vadd.f32 %v149, %v152
    %s154 = sld [smem:[#allocation7 + $0x83]]
    %v155 = vstv %s154
    %v156 = vmul.f32 %v155, %v117
    %v157 = vadd.f32 %v153, %v156
    %v158 = vtanh.pop %v157
    %v159 = vmul.f32 %v158, 0.5
    %v160 = vadd.f32 %v159, 0.5
    %s161 = scalar_lea.vmem [#allocation10], 1
    %162 = vst [vmem:[%s161] sm:$0x1] %v160
    %s163 = sld [smem:[#allocation8 + $0x2]]
    %s164 = sld [smem:[#allocation7 + $0x100]]
    %v165 = vstv %s164
    %v166 = vmul.f32 %v165, %v84
    %v167 = vstv %s163
    %v168 = vadd.f32 %v167, %v166
    %s169 = sld [smem:[#allocation7 + $0x101]]
    %v170 = vstv %s169
    %v171 = vmul.f32 %v170, %v95
    %v172 = vadd.f32 %v168, %v171
    %s173 = sld [smem:[#allocation7 + $0x102]]
    %v174 = vstv %s173
    %v175 = vmul.f32 %v174, %v106
    %v176 = vadd.f32 %v172, %v175
    %s177 = sld [smem:[#allocation7 + $0x103]]
    %v178 = vstv %s177
    %v179 = vmul.f32 %v178, %v117
    %v180 = vadd.f32 %v176, %v179
    %v181 = vtanh.pop %v180
    %v182 = vmul.f32 %v181, 0.5
    %v183 = vadd.f32 %v182, 0.5
    %s184 = scalar_lea.vmem [#allocation10], 2
    %185 = vst [vmem:[%s184] sm:$0x1] %v183
    %s186 = sld [smem:[#allocation8 + $0x3]]
    %s187 = sld [smem:[#allocation7 + $0x180]]
    %v188 = vstv %s187
    %v189 = vmul.f32 %v188, %v84
    %v190 = vstv %s186
    %v191 = vadd.f32 %v190, %v189
    %s192 = sld [smem:[#allocation7 + $0x181]]
    %v193 = vstv %s192
    %v194 = vmul.f32 %v193, %v95
    %v195 = vadd.f32 %v191, %v194
    %s196 = sld [smem:[#allocation7 + $0x182]]
    %v197 = vstv %s196
    %v198 = vmul.f32 %v197, %v106
    %v199 = vadd.f32 %v195, %v198
    %s200 = sld [smem:[#allocation7 + $0x183]]
    %v201 = vstv %s200
    %v202 = vmul.f32 %v201, %v117
    %v203 = vadd.f32 %v199, %v202
    %v204 = vtanh.pop %v203
    %v205 = vmul.f32 %v204, 0.5
    %v206 = vadd.f32 %v205, 0.5
    %s207 = scalar_lea.vmem [#allocation10], 3
    %208 = vst [vmem:[%s207] sm:$0x1] %v206
    %s209 = sld [smem:[#allocation8 + $0x4]]
    %s210 = sld [smem:[#allocation7 + $0x200]]
    %v211 = vstv %s210
    %v212 = vmul.f32 %v211, %v84
    %v213 = vstv %s209
    %v214 = vadd.f32 %v213, %v212
    %s215 = sld [smem:[#allocation7 + $0x201]]
    %v216 = vstv %s215
    %v217 = vmul.f32 %v216, %v95
    %v218 = vadd.f32 %v214, %v217
    %s219 = sld [smem:[#allocation7 + $0x202]]
    %v220 = vstv %s219
    %v221 = vmul.f32 %v220, %v106
    %v222 = vadd.f32 %v218, %v221
    %s223 = sld [smem:[#allocation7 + $0x203]]
    %v224 = vstv %s223
    %v225 = vmul.f32 %v224, %v117
    %v226 = vadd.f32 %v222, %v225
    %v227 = vtanh.pop %v226
    %v228 = vmul.f32 %v227, 0.5
    %v229 = vadd.f32 %v228, 0.5
    %s230 = scalar_lea.vmem [#allocation10], 4
    %231 = vst [vmem:[%s230] sm:$0x1] %v229
    %s232 = sld [smem:[#allocation8 + $0x5]]
    %s233 = sld [smem:[#allocation7 + $0x280]]
    %v234 = vstv %s233
    %v235 = vmul.f32 %v234, %v84
    %v236 = vstv %s232
    %v237 = vadd.f32 %v236, %v235
    %s238 = sld [smem:[#allocation7 + $0x281]]
    %v239 = vstv %s238
    %v240 = vmul.f32 %v239, %v95
    %v241 = vadd.f32 %v237, %v240
    %s242 = sld [smem:[#allocation7 + $0x282]]
    %v243 = vstv %s242
    %v244 = vmul.f32 %v243, %v106
    %v245 = vadd.f32 %v241, %v244
    %s246 = sld [smem:[#allocation7 + $0x283]]
    %v247 = vstv %s246
    %v248 = vmul.f32 %v247, %v117
    %v249 = vadd.f32 %v245, %v248
    %v250 = vtanh.pop %v249
    %v251 = vmul.f32 %v250, 0.5
    %v252 = vadd.f32 %v251, 0.5
    %s253 = scalar_lea.vmem [#allocation10], 5
    %254 = vst [vmem:[%s253] sm:$0x1] %v252
    %s255 = sld [smem:[#allocation8 + $0x6]]
    %s256 = sld [smem:[#allocation7 + $0x300]]
    %v257 = vstv %s256
    %v258 = vmul.f32 %v257, %v84
    %v259 = vstv %s255
    %v260 = vadd.f32 %v259, %v258
    %s261 = sld [smem:[#allocation7 + $0x301]]
    %v262 = vstv %s261
    %v263 = vmul.f32 %v262, %v95
    %v264 = vadd.f32 %v260, %v263
    %s265 = sld [smem:[#allocation7 + $0x302]]
    %v266 = vstv %s265
    %v267 = vmul.f32 %v266, %v106
    %v268 = vadd.f32 %v264, %v267
    %s269 = sld [smem:[#allocation7 + $0x303]]
    %v270 = vstv %s269
    %v271 = vmul.f32 %v270, %v117
    %v272 = vadd.f32 %v268, %v271
    %v273 = vtanh.pop %v272
    %v274 = vmul.f32 %v273, 0.5
    %v275 = vadd.f32 %v274, 0.5
    %s276 = scalar_lea.vmem [#allocation10], 6
    %277 = vst [vmem:[%s276] sm:$0x1] %v275
    %s278 = sld [smem:[#allocation8 + $0x7]]
    %s279 = sld [smem:[#allocation7 + $0x380]]
    %v280 = vstv %s279
    %v281 = vmul.f32 %v280, %v84
    %v282 = vstv %s278
    %v283 = vadd.f32 %v282, %v281
    %s284 = sld [smem:[#allocation7 + $0x381]]
    %v285 = vstv %s284
    %v286 = vmul.f32 %v285, %v95
    %v287 = vadd.f32 %v283, %v286
    %s288 = sld [smem:[#allocation7 + $0x382]]
    %v289 = vstv %s288
    %v290 = vmul.f32 %v289, %v106
    %v291 = vadd.f32 %v287, %v290
    %s292 = sld [smem:[#allocation7 + $0x383]]
    %v293 = vstv %s292
    %v294 = vmul.f32 %v293, %v117
    %v295 = vadd.f32 %v291, %v294
    %v296 = vtanh.pop %v295
    %v297 = vmul.f32 %v296, 0.5
    %v298 = vadd.f32 %v297, 0.5
    %s299 = scalar_lea.vmem [#allocation10], 7
    %300 = vst [vmem:[%s299] sm:$0x1] %v298
    %s301 = sld [smem:[#allocation8 + $0x8]]
    %s302 = sld [smem:[#allocation7 + $0x400]]
    %v303 = vstv %s302
    %v304 = vmul.f32 %v303, %v84
    %v305 = vstv %s301
    %v306 = vadd.f32 %v305, %v304
    %s307 = sld [smem:[#allocation7 + $0x401]]
    %v308 = vstv %s307
    %v309 = vmul.f32 %v308, %v95
    %v310 = vadd.f32 %v306, %v309
    %s311 = sld [smem:[#allocation7 + $0x402]]
    %v312 = vstv %s311
    %v313 = vmul.f32 %v312, %v106
    %v314 = vadd.f32 %v310, %v313
    %s315 = sld [smem:[#allocation7 + $0x403]]
    %v316 = vstv %s315
    %v317 = vmul.f32 %v316, %v117
    %v318 = vadd.f32 %v314, %v317
    %v319 = vtanh.pop %v318
    %v320 = vmul.f32 %v319, 0.5
    %v321 = vadd.f32 %v320, 0.5
    %s322 = scalar_lea.vmem [#allocation10], 8
    %323 = vst [vmem:[%s322] sm:$0x1] %v321
    // Predicated region
    $region38: #{tpu_custom_call.1} parent=1 // pred_check
      _
    $region39: #{tpu_custom_call.1} parent=1 // pred_check_branch
      %325 = sbr.rel (0) target = $region41
    $region40: #{tpu_custom_call.1} parent=1 // pred_region
      %s327 = ssub.s32 144, 144
      %328 = vsyncadd [#allocation3], %s327
      %s329 = sshll.u32 [#allocation10], 4
      %s330 = int_to_ptr.vmem [resolvable:$true] %s329
      %335 = dma.vmem_to_hbm [thread:$0]  %s330, 144, %s5, [#allocation3], 16, 16, 1
    $region41: #{tpu_custom_call.1} parent=1 // pred_fallthru
      _
    // Predicated region
    $region42: #{tpu_custom_call.1} parent=1 // pred_check
      _
    $region43: #{tpu_custom_call.1} parent=1 // pred_check_branch
      %337 = sbr.rel (0) target = $region45
    $region44: #{tpu_custom_call.1} parent=1 // pred_region
      %338 = dma.done [#allocation3], 144
    $region45: #{tpu_custom_call.1} parent=1 // pred_fallthru
      _
    %339 = vsyncpa [#allocation3], 1
    %340 = vsyncpa [#allocation4], 1
    %341 = vsyncpa [#allocation6], 1
    %342 = vsyncpa [#allocation9], 1

</llo_original>
